<compile_context>
chip_gen: v5e
topology: v5e:2x2
jax: 0.10.0
libtpu: 0.0.40
codegen_flags: <defaults>
</compile_context>

<pallas_src>
import functools

import jax
import jax.numpy as jnp
from jax import lax
from jax.experimental import pallas as pl
from jax.experimental.pallas import tpu as pltpu

_LANE = 128
_TARGET_BLOCK_BYTES = 8 * 1024 * 1024   # ~8 MiB streaming blocks (HBM roofline)
_MIN_PALLAS_BYTES = 1 * 1024 * 1024     # below this, plain jnp summary is faster


def _partial_sum_kernel(x_ref, out_ref, *, rows, block_rows, need_mask):
    """Each grid step reduces one (block_rows, 128) block to a (1, 128) row."""
    x32 = x_ref[...].astype(jnp.float32)
    if need_mask:
        # Mask rows of the padded tail block (garbage past the array end).
        row0 = pl.program_id(0) * block_rows
        row_ids = row0 + lax.broadcasted_iota(jnp.int32, (block_rows, 1), 0)
        x32 = jnp.where(row_ids < rows, x32, jnp.float32(0.0))
    # One sublane (XLU) reduce per multi-MiB block — hidden under the DMA.
    out_ref[...] = jnp.sum(x32, axis=0, keepdims=True)


def _pick_block_rows(rows: int, itemsize: int) -> int:
    """Rows per block targeting ~8 MiB; multiple of 256 covers all dtype packings."""
    target_rows = max(256, _TARGET_BLOCK_BYTES // (_LANE * itemsize))
    if rows <= target_rows:
        return rows  # single full-extent block — always a legal block shape
    return (target_rows // 256) * 256


def _pallas_partial_sums(x2d: jax.Array, block_rows: int) -> jax.Array:
    """Per-block partial sums of a lane-dense (rows, 128) array."""
    rows, cols = x2d.shape
    assert cols == _LANE
    need_mask = (rows % block_rows) != 0
    num_blocks = pl.cdiv(rows, block_rows)
    kernel = functools.partial(
        _partial_sum_kernel, rows=rows, block_rows=block_rows, need_mask=need_mask)
    return pl.pallas_call(
        kernel,
        out_shape=jax.ShapeDtypeStruct((num_blocks, _LANE), jnp.float32),
        grid=(num_blocks,),
        in_specs=[pl.BlockSpec((block_rows, _LANE), lambda i: (i, 0))],
        out_specs=pl.BlockSpec((1, _LANE), lambda i: (i, 0)),
        compiler_params=pltpu.CompilerParams(
            # Independent per-block partials: shard across both TCs on v7x.
            dimension_semantics=("parallel",),
            # 8 MiB blocks double-buffered fit here; also safe on v5e (16 MiB
            # default scoped) and v7x (64 MiB physical).
            vmem_limit_bytes=32 << 20,
        ),
        cost_estimate=pl.CostEstimate(
            flops=int(x2d.size),
            transcendentals=0,
            bytes_accessed=int(x2d.size * x2d.dtype.itemsize + num_blocks * _LANE * 4),
        ),
    )(x2d)


def print_layer(name: str, x: jax.Array, *, debug: bool = True,
                force_pallas: bool = False,
                _block_rows_override: int | None = None) -> jax.Array:
    """Pallas equivalent of PrintLayer(name)(x): prints a summary, returns x."""
    if not debug:
        return x  # production path: pure identity, no kernel launched

    total = int(x.size)
    use_pallas = (
        total > 0
        and total % _LANE == 0
        and (force_pallas or x.nbytes >= _MIN_PALLAS_BYTES)
    )

    if use_pallas:
        # Free view for contiguous row-major inputs (the default layout).
        x2d = x.reshape(total // _LANE, _LANE)
        rows = x2d.shape[0]
        block_rows = _block_rows_override or _pick_block_rows(rows, x.dtype.itemsize)
        partials = _pallas_partial_sums(x2d, block_rows)
        total_sum = jnp.sum(partials)
        first = x2d[0, 0].astype(jnp.float32)
    else:
        # TODO(synk): tensors whose element count is not a multiple of 128 (or
        #             tiny tensors) use a plain jnp summary instead of Pallas.
        if total == 0:
            total_sum = jnp.float32(0.0)
            first = jnp.float32(0.0)
        else:
            total_sum = jnp.sum(x.astype(jnp.float32))
            first = x.reshape(-1)[0].astype(jnp.float32)

    # Host-visible print (works in normal compiled runs, unlike pl.debug_print).
    jax.debug.print(
        f"{name} shape={tuple(x.shape)} dtype={x.dtype}" + " first={f} sum={s}",
        f=first, s=total_sum)

    # Identity: return the input itself — no copy, no extra HBM traffic.
    return x


if __name__ == "__main__":
    key = jax.random.PRNGKey(0)
    # Small NCHW input consistent with a CNN discriminator feature map.
    x = jax.random.normal(key, (2, 4, 16, 16), dtype=jnp.float32)

    # 1) Full layer: identity output + Pallas summary path (forced despite size).
    y = print_layer("disc_feat", x, force_pallas=True)
    y = jax.block_until_ready(y)
    assert y.shape == x.shape and y.dtype == x.dtype
    assert bool(jnp.all(y == x))

    # 2) Direct correctness check of the partial-sum kernel (single full block).
    x2d = x.reshape(-1, _LANE)                      # (16, 128)
    partials = jax.block_until_ready(_pallas_partial_sums(x2d, x2d.shape[0]))
    got = float(jnp.sum(partials))
    want = float(jnp.sum(x, dtype=jnp.float32))
    assert abs(got - want) <= 1e-3 * max(1.0, abs(want)), (got, want)

    # 3) Masked-tail path: rows=24 with block_rows=16 -> grid=2, 8 padded rows.
    x2 = jax.random.normal(jax.random.PRNGKey(0), (3, 4, 16, 16), jnp.float32)
    x2_2d = x2.reshape(-1, _LANE)                   # (24, 128)
    partials2 = jax.block_until_ready(_pallas_partial_sums(x2_2d, 16))
    got2 = float(jnp.sum(partials2))
    want2 = float(jnp.sum(x2, dtype=jnp.float32))
    assert abs(got2 - want2) <= 1e-3 * max(1.0, abs(want2)), (got2, want2)

    print("KERNEL_OK")
</pallas_src>

<mosaic_0001>
module attributes {stable_mosaic.version = 11 : i64} {
  func.func @_partial_sum_kernel(%arg0: i32, %arg1: memref<16x128xf32, #tpu.memory_space<vmem>>, %arg2: memref<1x128xf32, #tpu.memory_space<vmem>>) attributes {dimension_semantics = [#tpu.dimension_semantics<parallel>], iteration_bounds = array<i64: 1>, scalar_prefetch = 0 : i64, scratch_operands = 0 : i64, tpu.core_type = #tpu.core_type<tc>, window_params = [{transform_indices = @transform_0, window_bounds = array<i64: 16, 128>}, {transform_indices = @transform_1, window_bounds = array<i64: 1, 128>}]} {
    %c0 = arith.constant 0 : index
    %c0_0 = arith.constant 0 : index
    %0 = vector.load %arg1[%c0, %c0_0] : memref<16x128xf32, #tpu.memory_space<vmem>>, vector<16x128xf32>
    %cst = arith.constant dense<0.000000e+00> : vector<128xf32>
    %1 = vector.multi_reduction <add>, %0, %cst [0] : vector<16x128xf32> to vector<128xf32>
    %2 = vector.shape_cast %1 : vector<128xf32> to vector<1x128xf32>
    %c0_1 = arith.constant 0 : index
    %c0_2 = arith.constant 0 : index
    %3 = vector.load %arg2[%c0_1, %c0_2] : memref<1x128xf32, #tpu.memory_space<vmem>>, vector<1x128xf32>
    tpu.vector_store %arg2[%c0_1, %c0_2], %2 {strides = array<i32>} : memref<1x128xf32, #tpu.memory_space<vmem>>, vector<1x128xf32>,
    return
  }
  func.func @transform_0(%arg0: i32) -> (i32, i32) {
    %c0_i32 = arith.constant 0 : i32
    %c0_i32_0 = arith.constant 0 : i32
    return %arg0, %c0_i32 : i32, i32
  }
  func.func @transform_1(%arg0: i32) -> (i32, i32) {
    %c0_i32 = arith.constant 0 : i32
    %c0_i32_0 = arith.constant 0 : i32
    return %arg0, %c0_i32 : i32, i32
  }
}

</mosaic_0001>

<llo_original>
// kernel: tpu_custom_call.1
$region0: #{tpu_custom_call.1}
  #allocation0 [shape = 'u32[]', space=smem, size = 0x4, offset = 0x4, fixed_abs, tag = 'smem constant byte address 0x4 - core index']
  #allocation1 [shape = 'u32[72,128]{1,0:T(1,128)}', space=vmem, size = 0x9000, scoped, tag = 'internal scratch']
  %s0 = inlined_call_operand.hbm [shape: f32[16,128], index: 0, kind: input, shape index: {}]
  %s1 = inlined_call_operand.hbm [shape: f32[1,128], index: 1, kind: output, shape index: {}]
  %s2 = sld [smem:[#allocation0]]
  $region18: #{tpu_custom_call.1} parent=0
    _
  %s4 = ssub.s32 1, %s2
  %s5 = scalar_select 0, %s4, %s2
  $region1: #{tpu_custom_call.1} parent=0
    #allocation2 [shape = 'u8[8192]{0}', space=vmem, size = 0x2000, scoped, tag = 'input window, operand 0, single buffered']
    #allocation3 [shape = 's32[1]{0}', space=sflag, size = 0x4, scoped, tag = 'scoped memory for tpu_custom_call.1']
    #allocation4 [shape = 's32[1]{0}', space=sflag, size = 0x4, scoped, tag = 'scoped memory for tpu_custom_call.1']
    #allocation5 [shape = 'u8[512]{0}', space=vmem, size = 0x400, scoped, tag = 'output window, operand 0, single buffered']
    %6 = vsyncpa [#allocation3], 0
    %7 = vsyncpa [#allocation4], 0
    // Predicated region
    $region2: #{tpu_custom_call.1} parent=1 // pred_check
      _
    $region3: #{tpu_custom_call.1} parent=1 // pred_check_branch
      %9 = sbr.rel (0) target = $region5
    $region4: #{tpu_custom_call.1} parent=1 // pred_region
      %11 = vsyncadd [#allocation3], 0
      %s12 = sshll.u32 %s0, 4
      %s13 = int_to_ptr.hbm [resolvable:$true] %s12
      %s14 = sshll.u32 [#allocation2], 4
      %s15 = int_to_ptr.vmem [resolvable:$true] %s14
      %20 = dma.hbm_to_vmem [thread:$0]  %s13, 256, %s15, [#allocation3], 128, 128, 8
    $region5: #{tpu_custom_call.1} parent=1 // pred_fallthru
      _
    // Predicated region
    $region6: #{tpu_custom_call.1} parent=1 // pred_check
      _
    $region7: #{tpu_custom_call.1} parent=1 // pred_check_branch
      %22 = sbr.rel (0) target = $region9
    $region8: #{tpu_custom_call.1} parent=1 // pred_region
      %24 = dma.done [#allocation3], 256
    $region9: #{tpu_custom_call.1} parent=1 // pred_fallthru
      _
    %v25 = vld [vmem:[#allocation2] sm:$0xff]
    %v26 = vld [vmem:[#allocation2 + $0x8] sm:$0xff]
    %v27 = vadd.f32 %v25, %v26
    %v28 = vrot.slane %v27, 4
    %v29 = vadd.f32 %v27, %v28
    %v30 = vrot.slane %v29, 2
    %v31 = vadd.f32 %v29, %v30
    %v32 = vrot.slane %v31, 1
    %v33 = vadd.f32 %v31, %v32
    %34 = vst [vmem:[#allocation5] sm:$0x1] %v33
    // Predicated region
    $region10: #{tpu_custom_call.1} parent=1 // pred_check
      _
    $region11: #{tpu_custom_call.1} parent=1 // pred_check_branch
      %36 = sbr.rel (0) target = $region13
    $region12: #{tpu_custom_call.1} parent=1 // pred_region
      %38 = vsyncadd [#allocation4], 0
      %s40 = sshll.u32 [#allocation5], 4
      %s41 = int_to_ptr.vmem [resolvable:$true] %s40
      %s42 = sshll.u32 %s1, 4
      %s43 = int_to_ptr.hbm [resolvable:$true] %s42
      %45 = dma.vmem_to_hbm [thread:$0]  %s41, 16, %s43, [#allocation4]
    $region13: #{tpu_custom_call.1} parent=1 // pred_fallthru
      _
    // Predicated region
    $region14: #{tpu_custom_call.1} parent=1 // pred_check
      _
    $region15: #{tpu_custom_call.1} parent=1 // pred_check_branch
      %47 = sbr.rel (0) target = $region17
    $region16: #{tpu_custom_call.1} parent=1 // pred_region
      %49 = dma.done [#allocation4], 16
    $region17: #{tpu_custom_call.1} parent=1 // pred_fallthru
      _
    %50 = vsyncpa [#allocation3], 1
    %51 = vsyncpa [#allocation4], 1

</llo_original>
